<compile_context>
chip_gen: v5e
topology: v5e:2x2
jax: 0.10.0
libtpu: 0.0.40
codegen_flags: <defaults>
</compile_context>

<pallas_src>
import functools

import jax
import jax.numpy as jnp
from jax.experimental import pallas as pl
from jax.experimental.pallas import tpu as pltpu

FIRST_HIDDEN_LAYER_SIZE = 100
SECOND_HIDDEN_LAYER_SIZE = 50
OUTPUT_LAYER_SIZE = 10

_LANE = 128
_SUBLANE = 8
_MAX_TILE_B = 1024  # ~0.5 MiB bf16 x-tile; big enough to hide per-step overhead


def _round_up(x, m):
    return (x + m - 1) // m * m


H0_PAD = _round_up(FIRST_HIDDEN_LAYER_SIZE, _LANE)   # 128
H1_PAD = _round_up(SECOND_HIDDEN_LAYER_SIZE, _LANE)  # 128
OUT_PAD = _round_up(OUTPUT_LAYER_SIZE, _LANE)        # 128


def _mlp_kernel(x_ref, w0_ref, b0_ref, w1_ref, b1_ref, w2_ref, b2_ref, o_ref):
    # fc0 + ReLU   (bf16 x / w0 on the MXU, f32 accumulation)
    h0 = jnp.dot(x_ref[...], w0_ref[...], preferred_element_type=jnp.float32)
    h0 = jnp.maximum(h0 + b0_ref[...], 0.0)
    # fc1 + ReLU
    h1 = jnp.dot(h0.astype(w1_ref.dtype), w1_ref[...],
                 preferred_element_type=jnp.float32)
    h1 = jnp.maximum(h1 + b1_ref[...], 0.0)
    # fc2 (padded weight columns are zero, so padded logits = 0 + 0 bias)
    logits = jnp.dot(h1.astype(w2_ref.dtype), w2_ref[...],
                     preferred_element_type=jnp.float32) + b2_ref[...]
    # Mask padded lanes to -inf so they do not corrupt the max / log-sum-exp.
    lane = jax.lax.broadcasted_iota(jnp.int32, logits.shape, 1)
    logits = jnp.where(lane < OUTPUT_LAYER_SIZE, logits, -jnp.inf)
    # Numerically stable log_softmax over the (padded) feature axis.
    m = jnp.max(logits, axis=-1, keepdims=True)
    shifted = logits - m
    lse = jnp.log(jnp.sum(jnp.exp(shifted), axis=-1, keepdims=True))
    o_ref[...] = shifted - lse  # padded lanes hold -inf; sliced off in wrapper


@functools.partial(jax.jit, static_argnames=("image_size",))
def model_b_forward(x, params, image_size):
    """x: any shape whose trailing dims flatten to image_size (like torch .view())."""
    w0, b0, w1, b1, w2, b2 = params  # padded, transposed (in_pad, out_pad)

    xf = x.reshape(-1, image_size)
    B = xf.shape[0]
    k_pad = w0.shape[0]

    # Batch tile: big tiles (multiple of 256) when the batch is large so the
    # x stream is pipelined and the MXU M dimension is filled; tiny batches run
    # as a single sublane-aligned block.
    if B >= _MAX_TILE_B:
        tile_b = _MAX_TILE_B
    else:
        tile_b = _round_up(B, _SUBLANE)
    b_pad = _round_up(B, tile_b)

    # Stream x / weights as bf16 (f32 accumulation in-kernel); zero-pad batch
    # and the contraction dim to aligned sizes.
    xb = jnp.pad(xf.astype(jnp.bfloat16),
                 ((0, b_pad - B), (0, k_pad - image_size)))
    w0b = w0.astype(jnp.bfloat16)
    w1b = w1.astype(jnp.bfloat16)
    w2b = w2.astype(jnp.bfloat16)

    const = lambda shape: pl.BlockSpec(shape, lambda i: (0,) * len(shape))

    out = pl.pallas_call(
        _mlp_kernel,
        out_shape=jax.ShapeDtypeStruct((b_pad, OUT_PAD), jnp.float32),
        grid_spec=pl.GridSpec(
            grid=(b_pad // tile_b,),
            in_specs=[
                pl.BlockSpec((tile_b, k_pad), lambda i: (i, 0)),  # x: tiled over batch
                const(w0b.shape), const(b0.shape),                # weights/biases resident
                const(w1b.shape), const(b1.shape),
                const(w2b.shape), const(b2.shape),
            ],
            out_specs=pl.BlockSpec((tile_b, OUT_PAD), lambda i: (i, 0)),
        ),
        compiler_params=pltpu.CompilerParams(
            dimension_semantics=("parallel",),
        ),
    )(xb, w0b, b0, w1b, b1, w2b, b2)

    return out[:B, :OUTPUT_LAYER_SIZE]


def init_params(key, image_size):
    """nn.Linear-style init (uniform(-1/sqrt(fan_in), 1/sqrt(fan_in))),
    stored transposed (in, out) and zero-padded to lane-aligned shapes."""
    k_pad = _round_up(image_size, _LANE)

    def linear(key, fan_in, fan_out, in_pad, out_pad):
        kw, kb = jax.random.split(key)
        bound = 1.0 / jnp.sqrt(fan_in)
        w_t = jax.random.uniform(kw, (fan_in, fan_out), jnp.float32, -bound, bound)
        b = jax.random.uniform(kb, (fan_out,), jnp.float32, -bound, bound)
        w_t = jnp.pad(w_t, ((0, in_pad - fan_in), (0, out_pad - fan_out)))
        b = jnp.pad(b, (0, out_pad - fan_out)).reshape(1, out_pad)
        return w_t, b

    k0, k1, k2 = jax.random.split(key, 3)
    w0, b0 = linear(k0, image_size, FIRST_HIDDEN_LAYER_SIZE, k_pad, H0_PAD)
    w1, b1 = linear(k1, FIRST_HIDDEN_LAYER_SIZE, SECOND_HIDDEN_LAYER_SIZE, H0_PAD, H1_PAD)
    w2, b2 = linear(k2, SECOND_HIDDEN_LAYER_SIZE, OUTPUT_LAYER_SIZE, H1_PAD, OUT_PAD)
    return (w0, b0, w1, b1, w2, b2)


def reference_forward(x, params, image_size):
    """Pure-JAX reference with the same bf16-weight / f32-accumulate numerics."""
    w0, b0, w1, b1, w2, b2 = params
    w0 = w0[:image_size, :FIRST_HIDDEN_LAYER_SIZE]
    b0 = b0[:, :FIRST_HIDDEN_LAYER_SIZE]
    w1 = w1[:FIRST_HIDDEN_LAYER_SIZE, :SECOND_HIDDEN_LAYER_SIZE]
    b1 = b1[:, :SECOND_HIDDEN_LAYER_SIZE]
    w2 = w2[:SECOND_HIDDEN_LAYER_SIZE, :OUTPUT_LAYER_SIZE]
    b2 = b2[:, :OUTPUT_LAYER_SIZE]

    xf = x.reshape(-1, image_size).astype(jnp.bfloat16)
    h0 = jax.nn.relu(jnp.dot(xf, w0.astype(jnp.bfloat16),
                             preferred_element_type=jnp.float32) + b0)
    h1 = jax.nn.relu(jnp.dot(h0.astype(jnp.bfloat16), w1.astype(jnp.bfloat16),
                             preferred_element_type=jnp.float32) + b1)
    logits = jnp.dot(h1.astype(jnp.bfloat16), w2.astype(jnp.bfloat16),
                     preferred_element_type=jnp.float32) + b2
    return jax.nn.log_softmax(logits, axis=1)


if __name__ == "__main__":
    key = jax.random.PRNGKey(0)
    kx, kx2, kp = jax.random.split(key, 3)

    # Small synthetic "image" input in NCHW: batch=2, channels=1, 16x16.
    B, C, H, W = 2, 1, 16, 16
    image_size = C * H * W  # 256
    x = jax.random.normal(kx, (B, C, H, W), jnp.float32)

    params = init_params(kp, image_size)

    out = model_b_forward(x, params, image_size)
    out = jax.block_until_ready(out)
    ref = reference_forward(x, params, image_size)
    assert out.shape == (B, OUTPUT_LAYER_SIZE)
    assert jnp.allclose(out, ref, atol=2e-3, rtol=2e-3), float(
        jnp.max(jnp.abs(out - ref)))

    # Also exercise the multi-tile pipelined path (grid > 1, TILE_B = 1024).
    B2 = 2048
    x2 = jax.random.normal(kx2, (B2, C, H, W), jnp.float32)
    out2 = jax.block_until_ready(model_b_forward(x2, params, image_size))
    ref2 = reference_forward(x2, params, image_size)
    assert out2.shape == (B2, OUTPUT_LAYER_SIZE)
    assert jnp.allclose(out2, ref2, atol=2e-3, rtol=2e-3), float(
        jnp.max(jnp.abs(out2 - ref2)))

    print("KERNEL_OK")
</pallas_src>

<mosaic_0001>
module attributes {stable_mosaic.version = 11 : i64} {
  func.func @_mlp_kernel(%arg0: i32, %arg1: memref<8x256xbf16, #tpu.memory_space<vmem>>, %arg2: memref<256x128xbf16, #tpu.memory_space<vmem>>, %arg3: memref<1x128xf32, #tpu.memory_space<vmem>>, %arg4: memref<128x128xbf16, #tpu.memory_space<vmem>>, %arg5: memref<1x128xf32, #tpu.memory_space<vmem>>, %arg6: memref<128x128xbf16, #tpu.memory_space<vmem>>, %arg7: memref<1x128xf32, #tpu.memory_space<vmem>>, %arg8: memref<8x128xf32, #tpu.memory_space<vmem>>) attributes {dimension_semantics = [#tpu.dimension_semantics<parallel>], iteration_bounds = array<i64: 1>, scalar_prefetch = 0 : i64, scratch_operands = 0 : i64, tpu.core_type = #tpu.core_type<tc>, window_params = [{transform_indices = @transform_0, window_bounds = array<i64: 8, 256>}, {pipeline_mode = #tpu.pipeline_mode<synchronous>, transform_indices = @transform_1, window_bounds = array<i64: 256, 128>}, {pipeline_mode = #tpu.pipeline_mode<synchronous>, transform_indices = @transform_2, window_bounds = array<i64: 1, 128>}, {pipeline_mode = #tpu.pipeline_mode<synchronous>, transform_indices = @transform_3, window_bounds = array<i64: 128, 128>}, {pipeline_mode = #tpu.pipeline_mode<synchronous>, transform_indices = @transform_4, window_bounds = array<i64: 1, 128>}, {pipeline_mode = #tpu.pipeline_mode<synchronous>, transform_indices = @transform_5, window_bounds = array<i64: 128, 128>}, {pipeline_mode = #tpu.pipeline_mode<synchronous>, transform_indices = @transform_6, window_bounds = array<i64: 1, 128>}, {transform_indices = @transform_7, window_bounds = array<i64: 8, 128>}]} {
    %c0 = arith.constant 0 : index
    %c0_0 = arith.constant 0 : index
    %0 = vector.load %arg1[%c0, %c0_0] : memref<8x256xbf16, #tpu.memory_space<vmem>>, vector<8x256xbf16>
    %c0_1 = arith.constant 0 : index
    %c0_2 = arith.constant 0 : index
    %1 = vector.load %arg2[%c0_1, %c0_2] : memref<256x128xbf16, #tpu.memory_space<vmem>>, vector<256x128xbf16>
    %cst = arith.constant dense<0.000000e+00> : vector<8x128xf32>
    %2 = tpu.matmul %0, %1, %cst {dimension_numbers = #tpu.dot_dimension_numbers<[1], [0], [0], [1], [0, 0, 1, 1], [], []>} : vector<8x256xbf16>, vector<256x128xbf16>, vector<8x128xf32> -> vector<8x128xf32>
    %c0_3 = arith.constant 0 : index
    %c0_4 = arith.constant 0 : index
    %3 = vector.load %arg3[%c0_3, %c0_4] : memref<1x128xf32, #tpu.memory_space<vmem>>, vector<1x128xf32>
    %4 = vector.broadcast %3 : vector<1x128xf32> to vector<8x128xf32>
    %5 = arith.addf %2, %4 : vector<8x128xf32>
    %cst_5 = arith.constant 0.000000e+00 : f32
    %6 = vector.broadcast %cst_5 : f32 to vector<8x128xf32>
    %7 = arith.maximumf %5, %6 : vector<8x128xf32>
    %8 = arith.truncf %7 : vector<8x128xf32> to vector<8x128xbf16>
    %c0_6 = arith.constant 0 : index
    %c0_7 = arith.constant 0 : index
    %9 = vector.load %arg4[%c0_6, %c0_7] : memref<128x128xbf16, #tpu.memory_space<vmem>>, vector<128x128xbf16>
    %cst_8 = arith.constant dense<0.000000e+00> : vector<8x128xf32>
    %10 = tpu.matmul %8, %9, %cst_8 {dimension_numbers = #tpu.dot_dimension_numbers<[1], [0], [0], [1], [0, 0, 1, 1], [], []>} : vector<8x128xbf16>, vector<128x128xbf16>, vector<8x128xf32> -> vector<8x128xf32>
    %c0_9 = arith.constant 0 : index
    %c0_10 = arith.constant 0 : index
    %11 = vector.load %arg5[%c0_9, %c0_10] : memref<1x128xf32, #tpu.memory_space<vmem>>, vector<1x128xf32>
    %12 = vector.broadcast %11 : vector<1x128xf32> to vector<8x128xf32>
    %13 = arith.addf %10, %12 : vector<8x128xf32>
    %cst_11 = arith.constant 0.000000e+00 : f32
    %14 = vector.broadcast %cst_11 : f32 to vector<8x128xf32>
    %15 = arith.maximumf %13, %14 : vector<8x128xf32>
    %16 = arith.truncf %15 : vector<8x128xf32> to vector<8x128xbf16>
    %c0_12 = arith.constant 0 : index
    %c0_13 = arith.constant 0 : index
    %17 = vector.load %arg6[%c0_12, %c0_13] : memref<128x128xbf16, #tpu.memory_space<vmem>>, vector<128x128xbf16>
    %cst_14 = arith.constant dense<0.000000e+00> : vector<8x128xf32>
    %18 = tpu.matmul %16, %17, %cst_14 {dimension_numbers = #tpu.dot_dimension_numbers<[1], [0], [0], [1], [0, 0, 1, 1], [], []>} : vector<8x128xbf16>, vector<128x128xbf16>, vector<8x128xf32> -> vector<8x128xf32>
    %c0_15 = arith.constant 0 : index
    %c0_16 = arith.constant 0 : index
    %19 = vector.load %arg7[%c0_15, %c0_16] : memref<1x128xf32, #tpu.memory_space<vmem>>, vector<1x128xf32>
    %20 = vector.broadcast %19 : vector<1x128xf32> to vector<8x128xf32>
    %21 = arith.addf %18, %20 : vector<8x128xf32>
    %22 = tpu.iota {dimensions = array<i32: 1>} : vector<8x128xi32>
    %c10_i32 = arith.constant 10 : i32
    %23 = vector.broadcast %c10_i32 : i32 to vector<8x128xi32>
    %24 = arith.cmpi slt, %22, %23 : vector<8x128xi32>
    %cst_17 = arith.constant 0xFF800000 : f32
    %25 = vector.broadcast %cst_17 : f32 to vector<8x128xf32>
    %26 = arith.select %24, %21, %25 : vector<8x128xi1>, vector<8x128xf32>
    %cst_18 = arith.constant dense<0xFF800000> : vector<8xf32>
    %27 = vector.multi_reduction <maximumf>, %26, %cst_18 [1] : vector<8x128xf32> to vector<8xf32>
    %28 = vector.shape_cast %27 : vector<8xf32> to vector<8x1xf32>
    %29 = vector.broadcast %28 : vector<8x1xf32> to vector<8x128xf32>
    %30 = arith.subf %26, %29 : vector<8x128xf32>
    %31 = math.exp %30 : vector<8x128xf32>
    %cst_19 = arith.constant dense<0.000000e+00> : vector<8xf32>
    %32 = vector.multi_reduction <add>, %31, %cst_19 [1] : vector<8x128xf32> to vector<8xf32>
    %33 = vector.shape_cast %32 : vector<8xf32> to vector<8x1xf32>
    %34 = math.log %33 : vector<8x1xf32>
    %35 = vector.broadcast %34 : vector<8x1xf32> to vector<8x128xf32>
    %36 = arith.subf %30, %35 : vector<8x128xf32>
    %c0_20 = arith.constant 0 : index
    %c0_21 = arith.constant 0 : index
    %37 = vector.load %arg8[%c0_20, %c0_21] : memref<8x128xf32, #tpu.memory_space<vmem>>, vector<8x128xf32>
    tpu.vector_store %arg8[%c0_20, %c0_21], %36 {strides = array<i32>} : memref<8x128xf32, #tpu.memory_space<vmem>>, vector<8x128xf32>,
    return
  }
  func.func @transform_0(%arg0: i32) -> (i32, i32) {
    %c0_i32 = arith.constant 0 : i32
    %c0_i32_0 = arith.constant 0 : i32
    return %arg0, %c0_i32 : i32, i32
  }
  func.func @transform_1(%arg0: i32) -> (i32, i32) {
    %c0_i32 = arith.constant 0 : i32
    %c0_i32_0 = arith.constant 0 : i32
    %c0_i32_1 = arith.constant 0 : i32
    return %c0_i32, %c0_i32_0 : i32, i32
  }
  func.func @transform_2(%arg0: i32) -> (i32, i32) {
    %c0_i32 = arith.constant 0 : i32
    %c0_i32_0 = arith.constant 0 : i32
    %c0_i32_1 = arith.constant 0 : i32
    return %c0_i32, %c0_i32_0 : i32, i32
  }
  func.func @transform_3(%arg0: i32) -> (i32, i32) {
    %c0_i32 = arith.constant 0 : i32
    %c0_i32_0 = arith.constant 0 : i32
    %c0_i32_1 = arith.constant 0 : i32
    return %c0_i32, %c0_i32_0 : i32, i32
  }
  func.func @transform_4(%arg0: i32) -> (i32, i32) {
    %c0_i32 = arith.constant 0 : i32
    %c0_i32_0 = arith.constant 0 : i32
    %c0_i32_1 = arith.constant 0 : i32
    return %c0_i32, %c0_i32_0 : i32, i32
  }
  func.func @transform_5(%arg0: i32) -> (i32, i32) {
    %c0_i32 = arith.constant 0 : i32
    %c0_i32_0 = arith.constant 0 : i32
    %c0_i32_1 = arith.constant 0 : i32
    return %c0_i32, %c0_i32_0 : i32, i32
  }
  func.func @transform_6(%arg0: i32) -> (i32, i32) {
    %c0_i32 = arith.constant 0 : i32
    %c0_i32_0 = arith.constant 0 : i32
    %c0_i32_1 = arith.constant 0 : i32
    return %c0_i32, %c0_i32_0 : i32, i32
  }
  func.func @transform_7(%arg0: i32) -> (i32, i32) {
    %c0_i32 = arith.constant 0 : i32
    %c0_i32_0 = arith.constant 0 : i32
    return %arg0, %c0_i32 : i32, i32
  }
}

</mosaic_0001>

<llo_original>
// kernel: model_b_forward.1
$region0: #{model_b_forward.1}
  #allocation0 [shape = 'u32[]', space=smem, size = 0x4, offset = 0x4, fixed_abs, tag = 'smem constant byte address 0x4 - core index']
  #allocation1 [shape = 'u32[72,128]{1,0:T(1,128)}', space=vmem, size = 0x9000, scoped, tag = 'internal scratch']
  %s0 = inlined_call_operand.vmem [shape: bf16[8,256], index: 0, kind: input, shape index: {}]
  %s1 = inlined_call_operand.vmem [shape: bf16[256,128], index: 1, kind: input, shape index: {}]
  %s2 = inlined_call_operand.vmem [shape: f32[1,128], index: 2, kind: input, shape index: {}]
  %s3 = inlined_call_operand.vmem [shape: bf16[128,128], index: 3, kind: input, shape index: {}]
  %s4 = inlined_call_operand.vmem [shape: f32[1,128], index: 4, kind: input, shape index: {}]
  %s5 = inlined_call_operand.vmem [shape: bf16[128,128], index: 5, kind: input, shape index: {}]
  %s6 = inlined_call_operand.vmem [shape: f32[1,128], index: 6, kind: input, shape index: {}]
  %s7 = inlined_call_operand.vmem [shape: f32[8,128], index: 7, kind: output, shape index: {}]
  %s8 = sld [smem:[#allocation0]]
  $region38: #{model_b_forward.1} parent=0
    _
  %s10 = ssub.s32 1, %s8
  %s11 = scalar_select 0, %s10, %s8
  // Predicated region
  $region2: #{model_b_forward.1} parent=0 // pred_check
    _
  $region3: #{model_b_forward.1} parent=0 // pred_check_branch
    %13 = sbr.rel (0) target = $region5
  $region4: #{model_b_forward.1} parent=0 // pred_region
    _
  $region5: #{model_b_forward.1} parent=0 // pred_fallthru
    _
  // Predicated region
  $region6: #{model_b_forward.1} parent=0 // pred_check
    _
  $region7: #{model_b_forward.1} parent=0 // pred_check_branch
    %15 = sbr.rel (0) target = $region9
  $region8: #{model_b_forward.1} parent=0 // pred_region
    _
  $region9: #{model_b_forward.1} parent=0 // pred_fallthru
    _
  // Predicated region
  $region10: #{model_b_forward.1} parent=0 // pred_check
    _
  $region11: #{model_b_forward.1} parent=0 // pred_check_branch
    %17 = sbr.rel (0) target = $region13
  $region12: #{model_b_forward.1} parent=0 // pred_region
    _
  $region13: #{model_b_forward.1} parent=0 // pred_fallthru
    _
  // Predicated region
  $region14: #{model_b_forward.1} parent=0 // pred_check
    _
  $region15: #{model_b_forward.1} parent=0 // pred_check_branch
    %19 = sbr.rel (0) target = $region17
  $region16: #{model_b_forward.1} parent=0 // pred_region
    _
  $region17: #{model_b_forward.1} parent=0 // pred_fallthru
    _
  // Predicated region
  $region18: #{model_b_forward.1} parent=0 // pred_check
    _
  $region19: #{model_b_forward.1} parent=0 // pred_check_branch
    %21 = sbr.rel (0) target = $region21
  $region20: #{model_b_forward.1} parent=0 // pred_region
    _
  $region21: #{model_b_forward.1} parent=0 // pred_fallthru
    _
  // Predicated region
  $region22: #{model_b_forward.1} parent=0 // pred_check
    _
  $region23: #{model_b_forward.1} parent=0 // pred_check_branch
    %23 = sbr.rel (0) target = $region25
  $region24: #{model_b_forward.1} parent=0 // pred_region
    _
  $region25: #{model_b_forward.1} parent=0 // pred_fallthru
    _
  // Predicated region
  $region26: #{model_b_forward.1} parent=0 // pred_check
    _
  $region27: #{model_b_forward.1} parent=0 // pred_check_branch
    %25 = sbr.rel (0) target = $region29
  $region28: #{model_b_forward.1} parent=0 // pred_region
    _
  $region29: #{model_b_forward.1} parent=0 // pred_fallthru
    _
  %v26 = vld [vmem:[%s0] sm:$0xff]
  %v27 = vld [vmem:[%s1] sm:$0xf]
  %v28 = vld [vmem:[%s1 + $0x4] sm:$0xf]
  %v29 = vld [vmem:[%s1 + $0x8] sm:$0xf]
  %v30 = vld [vmem:[%s1 + $0xc] sm:$0xf]
  %v31 = vld [vmem:[%s1 + $0x10] sm:$0xf]
  %v32 = vld [vmem:[%s1 + $0x14] sm:$0xf]
  %v33 = vld [vmem:[%s1 + $0x18] sm:$0xf]
  %v34 = vld [vmem:[%s1 + $0x1c] sm:$0xf]
  %v35 = vld [vmem:[%s1 + $0x20] sm:$0xf]
  %v36 = vld [vmem:[%s1 + $0x24] sm:$0xf]
  %v37 = vld [vmem:[%s1 + $0x28] sm:$0xf]
  %v38 = vld [vmem:[%s1 + $0x2c] sm:$0xf]
  %v39 = vld [vmem:[%s1 + $0x30] sm:$0xf]
  %v40 = vld [vmem:[%s1 + $0x34] sm:$0xf]
  %v41 = vld [vmem:[%s1 + $0x38] sm:$0xf]
  %v42 = vld [vmem:[%s1 + $0x3c] sm:$0xf]
  %v43 = vld [vmem:[%s1 + $0x40] sm:$0xf]
  %v44 = vld [vmem:[%s1 + $0x44] sm:$0xf]
  %v45 = vld [vmem:[%s1 + $0x48] sm:$0xf]
  %v46 = vld [vmem:[%s1 + $0x4c] sm:$0xf]
  %v47 = vld [vmem:[%s1 + $0x50] sm:$0xf]
  %v48 = vld [vmem:[%s1 + $0x54] sm:$0xf]
  %v49 = vld [vmem:[%s1 + $0x58] sm:$0xf]
  %v50 = vld [vmem:[%s1 + $0x5c] sm:$0xf]
  %v51 = vld [vmem:[%s1 + $0x60] sm:$0xf]
  %v52 = vld [vmem:[%s1 + $0x64] sm:$0xf]
  %v53 = vld [vmem:[%s1 + $0x68] sm:$0xf]
  %v54 = vld [vmem:[%s1 + $0x6c] sm:$0xf]
  %v55 = vld [vmem:[%s1 + $0x70] sm:$0xf]
  %v56 = vld [vmem:[%s1 + $0x74] sm:$0xf]
  %v57 = vld [vmem:[%s1 + $0x78] sm:$0xf]
  %v58 = vld [vmem:[%s1 + $0x7c] sm:$0xf]
  %v59 = vld [vmem:[%s2] sm:$0x1]
  %v61 = vperm.slane %v59, 0
  %v64 = vunpack.c.l.b16 %v26
  %v65 = vunpack.c.h.b16 %v26
  %v66 = vpack.c.b16 %v64, %v64
  %v67 = vpack.c.b16 %v65, %v65
  %v102 = vunpack.c.l.b16 %v27
  %v103 = vunpack.c.l.b16 %v28
  %v104 = vunpack.c.l.b16 %v29
  %v105 = vunpack.c.l.b16 %v30
  %v106 = vunpack.c.l.b16 %v31
  %v107 = vunpack.c.l.b16 %v32
  %v108 = vunpack.c.l.b16 %v33
  %v109 = vunpack.c.l.b16 %v34
  %v110 = vunpack.c.l.b16 %v35
  %v111 = vunpack.c.l.b16 %v36
  %v112 = vunpack.c.l.b16 %v37
  %v113 = vunpack.c.l.b16 %v38
  %v114 = vunpack.c.l.b16 %v39
  %v115 = vunpack.c.l.b16 %v40
  %v116 = vunpack.c.l.b16 %v41
  %v117 = vunpack.c.l.b16 %v42
  %v118 = vunpack.c.l.b16 %v43
  %v119 = vunpack.c.l.b16 %v44
  %v120 = vunpack.c.l.b16 %v45
  %v121 = vunpack.c.l.b16 %v46
  %v122 = vunpack.c.l.b16 %v47
  %v123 = vunpack.c.l.b16 %v48
  %v124 = vunpack.c.l.b16 %v49
  %v125 = vunpack.c.l.b16 %v50
  %v126 = vunpack.c.l.b16 %v51
  %v127 = vunpack.c.l.b16 %v52
  %v128 = vunpack.c.l.b16 %v53
  %v129 = vunpack.c.l.b16 %v54
  %v130 = vunpack.c.l.b16 %v55
  %v131 = vunpack.c.l.b16 %v56
  %v132 = vunpack.c.l.b16 %v57
  %v133 = vunpack.c.l.b16 %v58
  %v134 = vpack.c.b16 %v103, %v102
  %v135 = vpack.c.b16 %v105, %v104
  %v136 = vpack.c.b16 %v107, %v106
  %v137 = vpack.c.b16 %v109, %v108
  %v138 = vpack.c.b16 %v111, %v110
  %v139 = vpack.c.b16 %v113, %v112
  %v140 = vpack.c.b16 %v115, %v114
  %v141 = vpack.c.b16 %v117, %v116
  %v142 = vpack.c.b16 %v119, %v118
  %v143 = vpack.c.b16 %v121, %v120
  %v144 = vpack.c.b16 %v123, %v122
  %v145 = vpack.c.b16 %v125, %v124
  %v146 = vpack.c.b16 %v127, %v126
  %v147 = vpack.c.b16 %v129, %v128
  %v148 = vpack.c.b16 %v131, %v130
  %v149 = vpack.c.b16 %v133, %v132
  %166 = vmatpush.bf16.msra.mxu0 %v141
  %167 = vmatpush.bf16.msra.mxu0 %v140
  %168 = vmatpush.bf16.msra.mxu0 %v139
  %169 = vmatpush.bf16.msra.mxu0 %v138
  %170 = vmatpush.bf16.msra.mxu0 %v137
  %171 = vmatpush.bf16.msra.mxu0 %v136
  %172 = vmatpush.bf16.msra.mxu0 %v135
  %173 = vmatpush.bf16.msra.mxu0 %v134
  %174 = vmatmul.bf16.gmra.mxu0 %v66
  %v175 = vpop.f32.mrf.mxu0
  %v176 = vadd.f32 %v61, %v175
  %v177 = vpop.f32.mrf.mxu0
  %178 = vdwg.mxu0
  %179 = vmatpush.bf16.msra.mxu0 %v149
  %180 = vmatpush.bf16.msra.mxu0 %v148
  %181 = vmatpush.bf16.msra.mxu0 %v147
  %182 = vmatpush.bf16.msra.mxu0 %v146
  %183 = vmatpush.bf16.msra.mxu0 %v145
  %184 = vmatpush.bf16.msra.mxu0 %v144
  %185 = vmatpush.bf16.msra.mxu0 %v143
  %186 = vmatpush.bf16.msra.mxu0 %v142
  %187 = vmatmul.bf16.gmra.mxu0 %v67
  %v188 = vpop.f32.mrf.mxu0
  %v189 = vadd.f32 %v176, %v188
  %v190 = vpop.f32.mrf.mxu0
  %191 = vdwg.mxu0
  %v192 = vmax.f32 %v189, 0.0
  %v193 = vpack.c.bf16 %v192, %v192
  %v194 = vld [vmem:[%s3] sm:$0xf]
  %v195 = vld [vmem:[%s3 + $0x4] sm:$0xf]
  %v196 = vld [vmem:[%s3 + $0x8] sm:$0xf]
  %v197 = vld [vmem:[%s3 + $0xc] sm:$0xf]
  %v198 = vld [vmem:[%s3 + $0x10] sm:$0xf]
  %v199 = vld [vmem:[%s3 + $0x14] sm:$0xf]
  %v200 = vld [vmem:[%s3 + $0x18] sm:$0xf]
  %v201 = vld [vmem:[%s3 + $0x1c] sm:$0xf]
  %v202 = vld [vmem:[%s3 + $0x20] sm:$0xf]
  %v203 = vld [vmem:[%s3 + $0x24] sm:$0xf]
  %v204 = vld [vmem:[%s3 + $0x28] sm:$0xf]
  %v205 = vld [vmem:[%s3 + $0x2c] sm:$0xf]
  %v206 = vld [vmem:[%s3 + $0x30] sm:$0xf]
  %v207 = vld [vmem:[%s3 + $0x34] sm:$0xf]
  %v208 = vld [vmem:[%s3 + $0x38] sm:$0xf]
  %v209 = vld [vmem:[%s3 + $0x3c] sm:$0xf]
  %v210 = vld [vmem:[%s4] sm:$0x1]
  %v212 = vperm.slane %v210, 0
  %v230 = vunpack.c.l.b16 %v194
  %v231 = vunpack.c.l.b16 %v195
  %v232 = vunpack.c.l.b16 %v196
  %v233 = vunpack.c.l.b16 %v197
  %v234 = vunpack.c.l.b16 %v198
  %v235 = vunpack.c.l.b16 %v199
  %v236 = vunpack.c.l.b16 %v200
  %v237 = vunpack.c.l.b16 %v201
  %v238 = vunpack.c.l.b16 %v202
  %v239 = vunpack.c.l.b16 %v203
  %v240 = vunpack.c.l.b16 %v204
  %v241 = vunpack.c.l.b16 %v205
  %v242 = vunpack.c.l.b16 %v206
  %v243 = vunpack.c.l.b16 %v207
  %v244 = vunpack.c.l.b16 %v208
  %v245 = vunpack.c.l.b16 %v209
  %v246 = vpack.c.b16 %v231, %v230
  %v247 = vpack.c.b16 %v233, %v232
  %v248 = vpack.c.b16 %v235, %v234
  %v249 = vpack.c.b16 %v237, %v236
  %v250 = vpack.c.b16 %v239, %v238
  %v251 = vpack.c.b16 %v241, %v240
  %v252 = vpack.c.b16 %v243, %v242
  %v253 = vpack.c.b16 %v245, %v244
  %262 = vmatpush.bf16.msra.mxu0 %v253
  %263 = vmatpush.bf16.msra.mxu0 %v252
  %264 = vmatpush.bf16.msra.mxu0 %v251
  %265 = vmatpush.bf16.msra.mxu0 %v250
  %266 = vmatpush.bf16.msra.mxu0 %v249
  %267 = vmatpush.bf16.msra.mxu0 %v248
  %268 = vmatpush.bf16.msra.mxu0 %v247
  %269 = vmatpush.bf16.msra.mxu0 %v246
  %270 = vmatmul.bf16.gmra.mxu0 %v193
  %v271 = vpop.f32.mrf.mxu0
  %v272 = vadd.f32 %v212, %v271
  %v273 = vpop.f32.mrf.mxu0
  %274 = vdwg.mxu0
  %v275 = vmax.f32 %v272, 0.0
  %v276 = vpack.c.bf16 %v275, %v275
  %v277 = vld [vmem:[%s5] sm:$0xf]
  %v278 = vld [vmem:[%s5 + $0x4] sm:$0xf]
  %v279 = vld [vmem:[%s5 + $0x8] sm:$0xf]
  %v280 = vld [vmem:[%s5 + $0xc] sm:$0xf]
  %v281 = vld [vmem:[%s5 + $0x10] sm:$0xf]
  %v282 = vld [vmem:[%s5 + $0x14] sm:$0xf]
  %v283 = vld [vmem:[%s5 + $0x18] sm:$0xf]
  %v284 = vld [vmem:[%s5 + $0x1c] sm:$0xf]
  %v285 = vld [vmem:[%s5 + $0x20] sm:$0xf]
  %v286 = vld [vmem:[%s5 + $0x24] sm:$0xf]
  %v287 = vld [vmem:[%s5 + $0x28] sm:$0xf]
  %v288 = vld [vmem:[%s5 + $0x2c] sm:$0xf]
  %v289 = vld [vmem:[%s5 + $0x30] sm:$0xf]
  %v290 = vld [vmem:[%s5 + $0x34] sm:$0xf]
  %v291 = vld [vmem:[%s5 + $0x38] sm:$0xf]
  %v292 = vld [vmem:[%s5 + $0x3c] sm:$0xf]
  %v293 = vld [vmem:[%s6] sm:$0x1]
  %v295 = vperm.slane %v293, 0
  %v313 = vunpack.c.l.b16 %v277
  %v314 = vunpack.c.l.b16 %v278
  %v315 = vunpack.c.l.b16 %v279
  %v316 = vunpack.c.l.b16 %v280
  %v317 = vunpack.c.l.b16 %v281
  %v318 = vunpack.c.l.b16 %v282
  %v319 = vunpack.c.l.b16 %v283
  %v320 = vunpack.c.l.b16 %v284
  %v321 = vunpack.c.l.b16 %v285
  %v322 = vunpack.c.l.b16 %v286
  %v323 = vunpack.c.l.b16 %v287
  %v324 = vunpack.c.l.b16 %v288
  %v325 = vunpack.c.l.b16 %v289
  %v326 = vunpack.c.l.b16 %v290
  %v327 = vunpack.c.l.b16 %v291
  %v328 = vunpack.c.l.b16 %v292
  %v329 = vpack.c.b16 %v314, %v313
  %v330 = vpack.c.b16 %v316, %v315
  %v331 = vpack.c.b16 %v318, %v317
  %v332 = vpack.c.b16 %v320, %v319
  %v333 = vpack.c.b16 %v322, %v321
  %v334 = vpack.c.b16 %v324, %v323
  %v335 = vpack.c.b16 %v326, %v325
  %v336 = vpack.c.b16 %v328, %v327
  %345 = vmatpush.bf16.msra.mxu0 %v336
  %346 = vmatpush.bf16.msra.mxu0 %v335
  %347 = vmatpush.bf16.msra.mxu0 %v334
  %348 = vmatpush.bf16.msra.mxu0 %v333
  %349 = vmatpush.bf16.msra.mxu0 %v332
  %350 = vmatpush.bf16.msra.mxu0 %v331
  %351 = vmatpush.bf16.msra.mxu0 %v330
  %352 = vmatpush.bf16.msra.mxu0 %v329
  %353 = vmatmul.bf16.gmra.mxu0 %v276
  %v354 = vpop.f32.mrf.mxu0
  %v355 = vadd.f32 %v295, %v354
  %v356 = vpop.f32.mrf.mxu0
  %357 = vdwg.mxu0
  %v358 = vlaneseq
  %v359 = vand.u32 %v358, 127
  %vm360 = vcmp.lt.s32.totalorder %v359, 10
  %v361 = vsel %vm360, %v355, -inf
  %362 = vmax.xlane.f32.xlu0 %v361
  %v363 = vpop.xlane.xlu0 %362
  %v364 = vsub.f32 %v361, %v363
  %v365 = vmul.f32 %v364, 1.442695
  %v366 = vpow.pop %v365
  %367 = vadd.xlane.f32.xlu0 %v366
  %v368 = vpop.xlane.xlu0 %367
  %v369 = vlog2.pop %v368
  %v370 = vmul.f32 %v369, 0.6931472
  %v371 = vsub.f32 %v364, %v370
  %372 = vst [vmem:[%s7] sm:$0xff] %v371
  // Predicated region
  $region30: #{model_b_forward.1} parent=0 // pred_check
    _
  $region31: #{model_b_forward.1} parent=0 // pred_check_branch
    %374 = sbr.rel (0) target = $region33
  $region32: #{model_b_forward.1} parent=0 // pred_region
    _
  $region33: #{model_b_forward.1} parent=0 // pred_fallthru
    _
  // Predicated region
  $region34: #{model_b_forward.1} parent=0 // pred_check
    _
  $region35: #{model_b_forward.1} parent=0 // pred_check_branch
    %376 = sbr.rel (0) target = $region37
  $region36: #{model_b_forward.1} parent=0 // pred_region
    _
  $region37: #{model_b_forward.1} parent=0 // pred_fallthru
    _

</llo_original>
